<compile_context>
chip_gen: v7x
topology: tpu7x:2x2x1
jax: 0.10.0
libtpu: 0.0.40
codegen_flags: <defaults>
</compile_context>

<pallas_src>
import functools

import jax
import jax.numpy as jnp
from jax import lax
from jax.experimental import pallas as pl
from jax.experimental.pallas import tpu as pltpu


def _round_up(a, b):
    return (a + b - 1) // b * b


def _vmem_limit_bytes():
    """Generation-aware scoped-VMEM limit (bytes)."""
    try:
        kind = jax.devices()[0].device_kind.lower()
    except Exception:
        kind = ""
    if "v7" in kind:
        return 48 * 1024 * 1024      # v7x: 64 MiB physical per TensorCore -> leave headroom
    if "v4" in kind or "v5" in kind or "v6" in kind:
        return 96 * 1024 * 1024      # 128 MiB physical VMEM
    return 32 * 1024 * 1024          # conservative default for unknown generations


# ---------------------------------------------------------------------------
# Kernel 1: conv as tiled matmul (MXU, K-tiled accumulation) + per-tile channel
#           sum / sum-of-squares for the BatchNorm statistics
# ---------------------------------------------------------------------------
def _conv_stats_kernel(x_ref, w_ref, y_ref, stats_ref, acc_ref):
    # x_ref: (tm, tk), w_ref: (tk, Cp), y_ref: (tm, Cp), stats_ref: (1, 2, Cp),
    # acc_ref: (tm, Cp) f32 scratch (persists across the K grid axis).
    k = pl.program_id(1)

    @pl.when(k == 0)
    def _():
        acc_ref[...] = jnp.zeros_like(acc_ref)

    acc_ref[...] += jnp.dot(x_ref[...], w_ref[...], preferred_element_type=jnp.float32)

    @pl.when(k == pl.num_programs(1) - 1)
    def _():
        acc = acc_ref[...]
        y_ref[...] = acc.astype(y_ref.dtype)
        # Two plain row stores (no concatenate / sublane relayout).
        stats_ref[0, 0:1, :] = jnp.sum(acc, axis=0, keepdims=True)        # channel sum
        stats_ref[0, 1:2, :] = jnp.sum(acc * acc, axis=0, keepdims=True)  # channel sum of sq


# ---------------------------------------------------------------------------
# Kernel 2: apply folded BatchNorm (scale/shift) + LeakyReLU, tiled over M
# ---------------------------------------------------------------------------
def _bn_act_kernel(y_ref, scale_ref, shift_ref, o_ref, *, neg_slope):
    z = y_ref[...].astype(jnp.float32) * scale_ref[...] + shift_ref[...]
    o_ref[...] = jnp.where(z >= 0, z, neg_slope * z).astype(o_ref.dtype)


# ---------------------------------------------------------------------------
# im2col (wrapper-side XLA glue, done in compute_dtype)
# ---------------------------------------------------------------------------
def _im2col_nhwc(x_nhwc, k, s, p):
    N, H, W, C = x_nhwc.shape
    xp = jnp.pad(x_nhwc, ((0, 0), (p, p), (p, p), (0, 0)))
    Ho = (H + 2 * p - k) // s + 1
    Wo = (W + 2 * p - k) // s + 1
    taps = []
    for dh in range(k):
        for dw in range(k):
            taps.append(xp[:, dh:dh + s * Ho:s, dw:dw + s * Wo:s, :])  # (N, Ho, Wo, C)
    cols = jnp.stack(taps, axis=3)                    # (N, Ho, Wo, k*k, C), order (dh, dw, ci)
    return cols.reshape(N * Ho * Wo, k * k * C), Ho, Wo


def down_conv_block(x_nchw, weight, bias, gamma, beta, *, eps=1e-5, neg_slope=0.01,
                    compute_dtype=jnp.bfloat16):
    """x_nchw: (N, Cin, H, W); weight: (Cout, Cin, 4, 4); bias/gamma/beta: (Cout,). Returns NCHW."""
    del bias  # cancelled exactly by the (training-mode) BatchNorm mean subtraction

    N, Cin, H, W = x_nchw.shape
    Cout, _, kh, kw = weight.shape
    assert (kh, kw) == (4, 4)
    out_dtype = x_nchw.dtype

    # --- im2col directly in compute_dtype (no f32 patches round trip) ---
    x_nhwc = jnp.transpose(x_nchw, (0, 2, 3, 1)).astype(compute_dtype)
    patches, Ho, Wo = _im2col_nhwc(x_nhwc, k=4, s=2, p=1)          # (M, K) compute_dtype
    M, K = patches.shape
    Cp = _round_up(Cout, 128)                                      # lane-dense channel axis
    bytes_cd = jnp.dtype(compute_dtype).itemsize

    # --- K tiling (reduction axis) for deep layers ---
    if K <= 2048:
        tk, Kp = K, K                                              # single K step, full-K blocks
    else:
        tk = 2048                                                  # multiple of 128
        Kp = _round_up(K, tk)
    kt = Kp // tk

    # --- VMEM-aware M tiling ---
    vmem_limit = _vmem_limit_bytes()
    budget = int(vmem_limit * 0.65)
    fixed = 2 * tk * Cp * bytes_cd + 2 * 2 * Cp * 4                # weight + stats (double-buffered)
    per_row = 2 * tk * bytes_cd + 2 * Cp * bytes_cd + Cp * 4       # patches + y out + f32 acc
    tm_cap = max(16, (budget - fixed) // per_row)
    tm = min(2048, tm_cap, _round_up(M, 16))
    if M > 16:
        # guarantee >= 2 tiles so the "parallel" M axis splits across v7x's two TensorCores
        tm = min(tm, _round_up((M + 1) // 2, 16))
    tm = max(16, (tm // 16) * 16)                                  # native bf16 (16,128) tile

    Mp = _round_up(M, tm)
    n_tiles = Mp // tm

    # --- padded / packed operands (pad folded into the already-compute_dtype patches) ---
    patches_p = jnp.pad(patches, ((0, Mp - M), (0, Kp - K)))
    w_mat = jnp.transpose(weight, (2, 3, 1, 0)).reshape(K, Cout)   # (dh, dw, ci) -> co
    w_mat = jnp.pad(w_mat, ((0, Kp - K), (0, Cp - Cout))).astype(compute_dtype)

    # --- pass 1: conv matmul (+K accumulation) + per-tile BN statistics ---
    conv_out, partial_stats = pl.pallas_call(
        _conv_stats_kernel,
        out_shape=(
            jax.ShapeDtypeStruct((Mp, Cp), compute_dtype),
            jax.ShapeDtypeStruct((n_tiles, 2, Cp), jnp.float32),
        ),
        grid_spec=pltpu.PrefetchScalarGridSpec(
            num_scalar_prefetch=0,
            grid=(n_tiles, kt),
            in_specs=[
                pl.BlockSpec((tm, tk), lambda i, k: (i, k)),
                pl.BlockSpec((tk, Cp), lambda i, k: (k, 0)),
            ],
            out_specs=(
                pl.BlockSpec((tm, Cp), lambda i, k: (i, 0)),
                pl.BlockSpec((1, 2, Cp), lambda i, k: (i, 0, 0)),
            ),
            scratch_shapes=[pltpu.VMEM((tm, Cp), jnp.float32)],
        ),
        compiler_params=pltpu.CompilerParams(
            dimension_semantics=("parallel", "arbitrary"),
            vmem_limit_bytes=vmem_limit),
    )(patches_p, w_mat)

    # --- tiny global reduction + folded BN parameters (padded rows contribute zeros) ---
    stats = jnp.sum(partial_stats, axis=0)                         # (2, Cp)
    mean = stats[0] / M
    var = jnp.maximum(stats[1] / M - mean * mean, 0.0)             # biased batch variance
    inv = lax.rsqrt(var + eps)
    gamma_p = jnp.pad(gamma.astype(jnp.float32), (0, Cp - Cout))
    beta_p = jnp.pad(beta.astype(jnp.float32), (0, Cp - Cout))
    scale = (gamma_p * inv).reshape(1, Cp)
    shift = (beta_p - mean * gamma_p * inv).reshape(1, Cp)

    # --- pass 2: tiled BN apply + LeakyReLU (lane-dense, compute_dtype output) ---
    bn_out = pl.pallas_call(
        functools.partial(_bn_act_kernel, neg_slope=neg_slope),
        out_shape=jax.ShapeDtypeStruct((Mp, Cp), compute_dtype),
        grid_spec=pltpu.PrefetchScalarGridSpec(
            num_scalar_prefetch=0,
            grid=(n_tiles,),
            in_specs=[
                pl.BlockSpec((tm, Cp), lambda i: (i, 0)),
                pl.BlockSpec((1, Cp), lambda i: (0, 0)),
                pl.BlockSpec((1, Cp), lambda i: (0, 0)),
            ],
            out_specs=pl.BlockSpec((tm, Cp), lambda i: (i, 0)),
        ),
        compiler_params=pltpu.CompilerParams(
            dimension_semantics=("parallel",), vmem_limit_bytes=vmem_limit),
    )(conv_out, scale, shift)

    # slice away padding, back to NCHW in the caller's dtype
    out = bn_out[:M, :Cout].astype(out_dtype).reshape(N, Ho, Wo, Cout)
    return jnp.transpose(out, (0, 3, 1, 2))


# ---------------------------------------------------------------------------
# Pure-JAX reference (correctness check)
# ---------------------------------------------------------------------------
def _reference(x_nchw, weight, bias, gamma, beta, eps=1e-5, neg_slope=0.01):
    y = lax.conv_general_dilated(
        x_nchw, weight, window_strides=(2, 2), padding=((1, 1), (1, 1)),
        dimension_numbers=("NCHW", "OIHW", "NCHW"))
    y = y + bias.reshape(1, -1, 1, 1)
    mean = jnp.mean(y, axis=(0, 2, 3), keepdims=True)
    var = jnp.mean((y - mean) ** 2, axis=(0, 2, 3), keepdims=True)
    y = (y - mean) * lax.rsqrt(var + eps)
    y = gamma.reshape(1, -1, 1, 1) * y + beta.reshape(1, -1, 1, 1)
    return jnp.where(y >= 0, y, neg_slope * y)


if __name__ == "__main__":
    key = jax.random.PRNGKey(0)
    k_x, k_w, k_b, k_g, k_be = jax.random.split(key, 5)

    N, Cin, H, W = 2, 4, 16, 16
    Cout = 8

    x = jax.random.normal(k_x, (N, Cin, H, W), dtype=jnp.float32)
    fan_in = Cin * 4 * 4
    bound = 1.0 / (fan_in ** 0.5)
    weight = jax.random.uniform(k_w, (Cout, Cin, 4, 4), jnp.float32, -bound, bound)
    bias = jax.random.uniform(k_b, (Cout,), jnp.float32, -bound, bound)
    gamma = 1.0 + 0.1 * jax.random.normal(k_g, (Cout,), jnp.float32)
    beta = 0.1 * jax.random.normal(k_be, (Cout,), jnp.float32)

    ref = jax.block_until_ready(_reference(x, weight, bias, gamma, beta))

    # f32 path (bit-accurate check)
    out_f32 = jax.block_until_ready(
        down_conv_block(x, weight, bias, gamma, beta, compute_dtype=jnp.float32))
    assert out_f32.shape == (N, Cout, H // 2, W // 2), out_f32.shape
    assert out_f32.dtype == x.dtype, out_f32.dtype
    assert jnp.allclose(out_f32, ref, atol=1e-3, rtol=1e-3), \
        float(jnp.max(jnp.abs(out_f32 - ref)))

    # default bf16 path (perf configuration; f32 MXU accumulation)
    out_bf16 = jax.block_until_ready(down_conv_block(x, weight, bias, gamma, beta))
    assert out_bf16.shape == (N, Cout, H // 2, W // 2), out_bf16.shape
    assert out_bf16.dtype == x.dtype, out_bf16.dtype
    assert jnp.allclose(out_bf16, ref, atol=8e-2, rtol=8e-2), \
        float(jnp.max(jnp.abs(out_bf16 - ref)))

    print("KERNEL_OK")
</pallas_src>

<mosaic_0001>
module attributes {stable_mosaic.version = 11 : i64} {
  func.func @_conv_stats_kernel(%arg0: i32, %arg1: i32, %arg2: memref<64x64xf32, #tpu.memory_space<vmem>>, %arg3: memref<64x128xf32, #tpu.memory_space<vmem>>, %arg4: memref<64x128xf32, #tpu.memory_space<vmem>>, %arg5: memref<1x2x128xf32, #tpu.memory_space<vmem>>, %arg6: memref<64x128xf32, #tpu.memory_space<vmem>>) attributes {dimension_semantics = [#tpu.dimension_semantics<parallel>, #tpu.dimension_semantics<arbitrary>], iteration_bounds = array<i64: 2, 1>, scalar_prefetch = 0 : i64, scratch_operands = 1 : i64, tpu.core_type = #tpu.core_type<tc>, window_params = [{transform_indices = @transform_0, window_bounds = array<i64: 64, 64>}, {transform_indices = @transform_1, window_bounds = array<i64: 64, 128>}, {transform_indices = @transform_2, window_bounds = array<i64: 64, 128>}, {transform_indices = @transform_3, window_bounds = array<i64: 1, 2, 128>}]} {
    %c0_i32 = arith.constant 0 : i32
    %0 = arith.cmpi eq, %arg1, %c0_i32 : i32
    %1 = arith.extui %0 : i1 to i32
    %c0_i32_0 = arith.constant 0 : i32
    %2 = arith.cmpi ne, %1, %c0_i32_0 : i32
    scf.if %2 {
      %cst_10 = arith.constant 0.000000e+00 : f32
      %12 = vector.broadcast %cst_10 : f32 to vector<64x128xf32>
      %c0_11 = arith.constant 0 : index
      %c0_12 = arith.constant 0 : index
      %13 = vector.load %arg6[%c0_11, %c0_12] : memref<64x128xf32, #tpu.memory_space<vmem>>, vector<64x128xf32>
      tpu.vector_store %arg6[%c0_11, %c0_12], %12 {strides = array<i32>} : memref<64x128xf32, #tpu.memory_space<vmem>>, vector<64x128xf32>,
    } else {
    }
    %c0 = arith.constant 0 : index
    %c0_1 = arith.constant 0 : index
    %3 = vector.load %arg6[%c0, %c0_1] : memref<64x128xf32, #tpu.memory_space<vmem>>, vector<64x128xf32>
    %c0_2 = arith.constant 0 : index
    %c0_3 = arith.constant 0 : index
    %4 = vector.load %arg2[%c0_2, %c0_3] : memref<64x64xf32, #tpu.memory_space<vmem>>, vector<64x64xf32>
    %c0_4 = arith.constant 0 : index
    %c0_5 = arith.constant 0 : index
    %5 = vector.load %arg3[%c0_4, %c0_5] : memref<64x128xf32, #tpu.memory_space<vmem>>, vector<64x128xf32>
    %cst = arith.constant dense<0.000000e+00> : vector<64x128xf32>
    %6 = tpu.matmul %4, %5, %cst {dimension_numbers = #tpu.dot_dimension_numbers<[1], [0], [0], [1], [0, 0, 1, 1], [], []>} : vector<64x64xf32>, vector<64x128xf32>, vector<64x128xf32> -> vector<64x128xf32>
    %7 = arith.addf %3, %6 : vector<64x128xf32>
    %c0_6 = arith.constant 0 : index
    %c0_7 = arith.constant 0 : index
    %8 = vector.load %arg6[%c0_6, %c0_7] : memref<64x128xf32, #tpu.memory_space<vmem>>, vector<64x128xf32>
    tpu.vector_store %arg6[%c0_6, %c0_7], %7 {strides = array<i32>} : memref<64x128xf32, #tpu.memory_space<vmem>>, vector<64x128xf32>,
    %c0_i32_8 = arith.constant 0 : i32
    %9 = arith.cmpi eq, %arg1, %c0_i32_8 : i32
    %10 = arith.extui %9 : i1 to i32
    %c0_i32_9 = arith.constant 0 : i32
    %11 = arith.cmpi ne, %10, %c0_i32_9 : i32
    scf.if %11 {
      %c0_10 = arith.constant 0 : index
      %c0_11 = arith.constant 0 : index
      %12 = vector.load %arg6[%c0_10, %c0_11] : memref<64x128xf32, #tpu.memory_space<vmem>>, vector<64x128xf32>
      %c0_12 = arith.constant 0 : index
      %c0_13 = arith.constant 0 : index
      %13 = vector.load %arg4[%c0_12, %c0_13] : memref<64x128xf32, #tpu.memory_space<vmem>>, vector<64x128xf32>
      tpu.vector_store %arg4[%c0_12, %c0_13], %12 {strides = array<i32>} : memref<64x128xf32, #tpu.memory_space<vmem>>, vector<64x128xf32>,
      %cst_14 = arith.constant dense<0.000000e+00> : vector<128xf32>
      %14 = vector.multi_reduction <add>, %12, %cst_14 [0] : vector<64x128xf32> to vector<128xf32>
      %15 = vector.shape_cast %14 : vector<128xf32> to vector<1x128xf32>
      %c0_15 = arith.constant 0 : index
      %c0_16 = arith.constant 0 : index
      %c0_17 = arith.constant 0 : index
      %16 = vector.load %arg5[%c0_15, %c0_16, %c0_17] : memref<1x2x128xf32, #tpu.memory_space<vmem>>, vector<1x1x128xf32>
      %17 = vector.shape_cast %16 : vector<1x1x128xf32> to vector<1x128xf32>
      %18 = vector.shape_cast %15 : vector<1x128xf32> to vector<1x1x128xf32>
      tpu.vector_store %arg5[%c0_15, %c0_16, %c0_17], %18 {strides = array<i32>} : memref<1x2x128xf32, #tpu.memory_space<vmem>>, vector<1x1x128xf32>,
      %19 = arith.mulf %12, %12 : vector<64x128xf32>
      %cst_18 = arith.constant dense<0.000000e+00> : vector<128xf32>
      %20 = vector.multi_reduction <add>, %19, %cst_18 [0] : vector<64x128xf32> to vector<128xf32>
      %21 = vector.shape_cast %20 : vector<128xf32> to vector<1x128xf32>
      %c0_19 = arith.constant 0 : index
      %c1 = arith.constant 1 : index
      %c0_20 = arith.constant 0 : index
      %22 = vector.load %arg5[%c0_19, %c1, %c0_20] : memref<1x2x128xf32, #tpu.memory_space<vmem>>, vector<1x1x128xf32>
      %23 = vector.shape_cast %22 : vector<1x1x128xf32> to vector<1x128xf32>
      %24 = vector.shape_cast %21 : vector<1x128xf32> to vector<1x1x128xf32>
      tpu.vector_store %arg5[%c0_19, %c1, %c0_20], %24 {strides = array<i32>} : memref<1x2x128xf32, #tpu.memory_space<vmem>>, vector<1x1x128xf32>,
    } else {
    }
    return
  }
  func.func @transform_0(%arg0: i32, %arg1: i32) -> (i32, i32) {
    %c0_i32 = arith.constant 0 : i32
    return %arg0, %arg1 : i32, i32
  }
  func.func @transform_1(%arg0: i32, %arg1: i32) -> (i32, i32) {
    %c0_i32 = arith.constant 0 : i32
    %c0_i32_0 = arith.constant 0 : i32
    return %arg1, %c0_i32 : i32, i32
  }
  func.func @transform_2(%arg0: i32, %arg1: i32) -> (i32, i32) {
    %c0_i32 = arith.constant 0 : i32
    %c0_i32_0 = arith.constant 0 : i32
    return %arg0, %c0_i32 : i32, i32
  }
  func.func @transform_3(%arg0: i32, %arg1: i32) -> (i32, i32, i32) {
    %c0_i32 = arith.constant 0 : i32
    %c0_i32_0 = arith.constant 0 : i32
    %c0_i32_1 = arith.constant 0 : i32
    return %arg0, %c0_i32, %c0_i32_0 : i32, i32, i32
  }
}

</mosaic_0001>

<llo_original>
// kernel: tpu_custom_call.1
$region0: #{tpu_custom_call.1}
  #allocation0 [shape = 'u32[]', space=smem, size = 0x4, offset = 0x4, fixed_abs, tag = 'smem constant byte address 0x4 - core index']
  #allocation1 [shape = 'u32[144,128]{1,0:T(1,128)}', space=vmem, size = 0x12000, scoped, tag = 'internal scratch']
  #allocation2 [shape = 'f32[64,128]{1,0:T(8,128)}', space=vmem, size = 0x8000, scoped, tag = 'scratch operand']
  %s0 = inlined_call_operand.vmem [shape: f32[128,64], index: 0, kind: input, shape index: {}]
  %s1 = inlined_call_operand.vmem [shape: f32[64,128], index: 1, kind: input, shape index: {}]
  %s2 = inlined_call_operand.hbm [shape: f32[128,128], index: 2, kind: output, shape index: {0}]
  %s3 = inlined_call_operand.hbm [shape: f32[2,2,128], index: 3, kind: output, shape index: {1}]
  %4 = xla_tuple %s2, %s3
  %s5 = sld [smem:[#allocation0]]
  $region57: #{tpu_custom_call.1} parent=0
    _
  %s7 = ssub.s32 1, %s5
  %s8 = scalar_select 0, %s7, %s5
  $region1: #{tpu_custom_call.1} parent=0
    #allocation3 [shape = 'u8[65536]{0}', space=vmem, size = 0x10000, scoped, tag = 'output window, operand 0']
    #allocation4 [shape = 's32[2]{0}', space=sflag, size = 0x8, scoped, tag = 'scoped memory for tpu_custom_call.1']
    #allocation5 [shape = 'u8[2048]{0}', space=vmem, size = 0x800, scoped, tag = 'output window, operand 1']
    #allocation6 [shape = 's32[2]{0}', space=sflag, size = 0x8, scoped, tag = 'scoped memory for tpu_custom_call.1']
    %9 = vsyncpa [#allocation4], 0
    %s10 = scalar_lea.sflag [#allocation4], 1
    %11 = vsyncpa %s10, 0
    %12 = vsyncpa [#allocation6], 0
    %s13 = scalar_lea.sflag [#allocation6], 1
    %14 = vsyncpa %s13, 0
    loop: start=0, step=1, limit=4
    $region2: #{tpu_custom_call.1} parent=1 // loop_pre_header
      _
    $region3: #{tpu_custom_call.1} parent=1 // loop_header
      %s16 = sphi 0, %s20
      %p17 = scmp.ge.s32.totalorder %s16, 4
      %s23 = sphi 0, %s35
      %s24 = sphi 0, %s31
      %s25 = sphi 0, %s23
      %s26 = sphi 0, %s24
      %s27 = sphi 0, %s25
      %s28 = sphi 0, %s26
      %s40 = sphi 0, %s42
      %s43 = sphi 0, %s40
      %s44 = sphi 0, %s43
      %s60 = sphi 0, %s44
      %s66 = sphi 0, %s68
      %s69 = sphi 0, %s66
      %s70 = sphi 0, %s69
      %s86 = sphi 0, %s70
      %s92 = sphi 0, %s94
      %s95 = sphi 0, %s92
      %s96 = sphi 0, %s95
      %s112 = sphi 0, %s96
      %s118 = sphi 0, %s120
      %s121 = sphi 0, %s118
      %s122 = sphi 0, %s121
      %s138 = sphi 0, %s122
    $region4: #{tpu_custom_call.1} parent=1 // loop_header_branch
      %19 = sbr.rel (%p17) target = $region8
    $region5: #{tpu_custom_call.1} parent=1 // loop_body
      %s21 = ssub.s32 %s16, 1
      %s22 = ssub.s32 %s16, 2
      %s29 = sadd.s32 1, %s24
      %p30 = scmp.ge.s32.totalorder %s29, 1
      %s31 = scalar_select %p30, 0, %s29
      %s32 = sadd.s32 1, %s23
      %s33 = scalar_select %p30, %s32, %s23
      %p34 = scmp.ge.s32.totalorder %s33, 2
      %s35 = scalar_select %p34, 0, %s33
      %s36 = ssub.s32 %s23, %s35
      %s37 = ssub.s32 %s24, %s31
      %s38 = sor.u32 %s36, %s37
      %p39 = scmp.eq.s32.totalorder %s38, 0
      %s41 = sadd.s32 %s40, 1
      %s42 = scalar_select %p39, %s40, %s41
      %p45 = pneg %p39
      %p46 = scmp.eq.s32.totalorder %s16, 1
      %p47 = por %p45, %p46
      %p48 = scmp.ne.s32.totalorder %s40, %s43
      %p49 = scmp.eq.s32.totalorder %s16, 0
      %p50 = por %p48, %p49
      %p51 = scmp.ne.s32.totalorder %s40, %s43
      %p52 = scmp.eq.s32.totalorder %s21, 1
      %p53 = por %p51, %p52
      %p54 = scmp.ne.s32.totalorder %s43, %s44
      %p55 = scmp.eq.s32.totalorder %s21, 0
      %p56 = por %p54, %p55
      %p57 = scmp.ne.s32.totalorder %s43, %s44
      %p58 = scmp.eq.s32.totalorder %s22, 1
      %p59 = por %p57, %p58
      %p61 = scmp.ne.s32.totalorder %s44, %s60
      %p62 = scmp.eq.s32.totalorder %s22, 0
      %p63 = por %p61, %p62
      %s64 = ssub.s32 %s24, %s31
      %p65 = scmp.eq.s32.totalorder %s64, 0
      %s67 = sadd.s32 %s66, 1
      %s68 = scalar_select %p65, %s66, %s67
      %p71 = pneg %p65
      %p72 = scmp.eq.s32.totalorder %s16, 1
      %p73 = por %p71, %p72
      %p74 = scmp.ne.s32.totalorder %s66, %s69
      %p75 = scmp.eq.s32.totalorder %s16, 0
      %p76 = por %p74, %p75
      %p77 = scmp.ne.s32.totalorder %s66, %s69
      %p78 = scmp.eq.s32.totalorder %s21, 1
      %p79 = por %p77, %p78
      %p80 = scmp.ne.s32.totalorder %s69, %s70
      %p81 = scmp.eq.s32.totalorder %s21, 0
      %p82 = por %p80, %p81
      %p83 = scmp.ne.s32.totalorder %s69, %s70
      %p84 = scmp.eq.s32.totalorder %s22, 1
      %p85 = por %p83, %p84
      %p87 = scmp.ne.s32.totalorder %s70, %s86
      %p88 = scmp.eq.s32.totalorder %s22, 0
      %p89 = por %p87, %p88
      %s90 = ssub.s32 %s23, %s35
      %p91 = scmp.eq.s32.totalorder %s90, 0
      %s93 = sadd.s32 %s92, 1
      %s94 = scalar_select %p91, %s92, %s93
      %p97 = pneg %p91
      %p98 = scmp.eq.s32.totalorder %s16, 1
      %p99 = por %p97, %p98
      %p100 = scmp.ne.s32.totalorder %s92, %s95
      %p101 = scmp.eq.s32.totalorder %s16, 0
      %p102 = por %p100, %p101
      %p103 = scmp.ne.s32.totalorder %s92, %s95
      %p104 = scmp.eq.s32.totalorder %s21, 1
      %p105 = por %p103, %p104
      %p106 = scmp.ne.s32.totalorder %s95, %s96
      %p107 = scmp.eq.s32.totalorder %s21, 0
      %p108 = por %p106, %p107
      %p109 = scmp.ne.s32.totalorder %s95, %s96
      %p110 = scmp.eq.s32.totalorder %s22, 1
      %p111 = por %p109, %p110
      %p113 = scmp.ne.s32.totalorder %s96, %s112
      %p114 = scmp.eq.s32.totalorder %s22, 0
      %p115 = por %p113, %p114
      %s116 = ssub.s32 %s23, %s35
      %p117 = scmp.eq.s32.totalorder %s116, 0
      %s119 = sadd.s32 %s118, 1
      %s120 = scalar_select %p117, %s118, %s119
      %p123 = pneg %p117
      %p124 = scmp.eq.s32.totalorder %s16, 1
      %p125 = por %p123, %p124
      %p126 = scmp.ne.s32.totalorder %s118, %s121
      %p127 = scmp.eq.s32.totalorder %s16, 0
      %p128 = por %p126, %p127
      %p129 = scmp.ne.s32.totalorder %s118, %s121
      %p130 = scmp.eq.s32.totalorder %s21, 1
      %p131 = por %p129, %p130
      %p132 = scmp.ne.s32.totalorder %s121, %s122
      %p133 = scmp.eq.s32.totalorder %s21, 0
      %p134 = por %p132, %p133
      %p135 = scmp.ne.s32.totalorder %s121, %s122
      %p136 = scmp.eq.s32.totalorder %s22, 1
      %p137 = por %p135, %p136
      %p139 = scmp.ne.s32.totalorder %s122, %s138
      %p140 = scmp.eq.s32.totalorder %s22, 0
      %p141 = por %p139, %p140
      %p142 = scmp.le.s32.totalorder 1, %s16
      %p143 = scmp.lt.s32.totalorder %s16, 3
      %p144 = pnand %p142, %p143
      %p145 = pneg %p144
      // Predicated region
      $region9: #{tpu_custom_call.1} parent=5 // pred_check
        _
      $region10: #{tpu_custom_call.1} parent=5 // pred_check_branch
        %147 = sbr.rel (%p144) target = $region12
      $region11: #{tpu_custom_call.1} parent=5 // pred_region
        %s148 = ssub.s32 %s16, 1
        // Predicated region
        $region13: #{tpu_custom_call.1} parent=11 // pred_check
          %p149 = pneg %p82
        $region14: #{tpu_custom_call.1} parent=11 // pred_check_branch
          %151 = sbr.rel (%p149) target = $region16
        $region15: #{tpu_custom_call.1} parent=11 // pred_region
          %s152 = smul.u32 8, %s26
          %p153 = scmp.lt.s32.totalorder %s152, 7
          %s154 = scalar_select %p153, %s152, 7
          %s155 = smul.addr %s154, 8
          %s156 = scalar_lea.vmem %s1, %s155
          %s157 = smul.u32 8, %s26
        $region16: #{tpu_custom_call.1} parent=11 // pred_fallthru
          _
      $region12: #{tpu_custom_call.1} parent=5 // pred_fallthru
        _
      %p158 = scmp.lt.s32.totalorder %s16, 2
      // Predicated region
      $region17: #{tpu_custom_call.1} parent=5 // pred_check
        %p159 = pneg %p158
      $region18: #{tpu_custom_call.1} parent=5 // pred_check_branch
        %161 = sbr.rel (%p159) target = $region20
      $region19: #{tpu_custom_call.1} parent=5 // pred_region
        // Predicated region
        $region21: #{tpu_custom_call.1} parent=19 // pred_check
          %p162 = pneg %p50
        $region22: #{tpu_custom_call.1} parent=19 // pred_check_branch
          %164 = sbr.rel (%p162) target = $region24
        $region23: #{tpu_custom_call.1} parent=19 // pred_region
          %s165 = smul.u32 8, %s23
          %p166 = scmp.lt.s32.totalorder %s165, 15
          %s167 = scalar_select %p166, %s165, 15
          %p168 = scmp.lt.s32.totalorder %s24, 0
          %s169 = scalar_select %p168, %s24, 0
          %s170 = sadd.s32 %s169, %s167
          %s171 = smul.addr %s170, 8
          %s172 = scalar_lea.vmem %s0, %s171
          %s173 = smul.u32 8, %s23
        $region24: #{tpu_custom_call.1} parent=19 // pred_fallthru
          _
      $region20: #{tpu_custom_call.1} parent=5 // pred_fallthru
        _
      %p174 = scmp.le.s32.totalorder 1, %s16
      %p175 = scmp.lt.s32.totalorder %s16, 3
      %p176 = pnand %p174, %p175
      %p177 = pneg %p176
      // Predicated region
      $region25: #{tpu_custom_call.1} parent=5 // pred_check
        _
      $region26: #{tpu_custom_call.1} parent=5 // pred_check_branch
        %179 = sbr.rel (%p176) target = $region28
      $region27: #{tpu_custom_call.1} parent=5 // pred_region
        %s180 = ssub.s32 %s16, 1
        %s181 = smul.u32 8, %s25
        %p182 = scmp.lt.s32.totalorder %s181, 15
        %s183 = scalar_select %p182, %s181, 15
        %p184 = scmp.lt.s32.totalorder %s26, 0
        %s185 = scalar_select %p184, %s26, 0
        %s186 = sadd.s32 %s185, %s183
        %s187 = smul.addr %s186, 8
        %s188 = scalar_lea.vmem %s0, %s187
        %p189 = pneg %p56
        %p190 = pneg %p53
        %s191 = smul.u32 8, %s26
        %p192 = scmp.lt.s32.totalorder %s191, 7
        %s193 = scalar_select %p192, %s191, 7
        %s194 = smul.addr %s193, 8
        %s195 = scalar_lea.vmem %s1, %s194
        %p196 = pneg %p82
        %p197 = pneg %p79
        %p198 = pneg %p108
        %p199 = pneg %p105
        %s200 = sand.u32 %s95, 1
        %s201 = scalar_lea.sflag [#allocation4], %s200
        %s202 = sand.u32 %s95, 1
        %s203 = smul.addr %s202, 64
        %s204 = scalar_lea.vmem [#allocation3], %s203
        %p205 = pneg %p134
        %p206 = pneg %p131
        %s207 = sand.u32 %s121, 1
        %s208 = scalar_lea.sflag [#allocation6], %s207
        %s209 = sand.u32 %s121, 1
        %s210 = smul.addr %s209, 2
        %s211 = scalar_lea.vmem [#allocation5], %s210
        %s212 = smul.u32 8, %s25
        %p213 = scmp.lt.s32.totalorder %s212, 15
        %s214 = scalar_select %p213, %s212, 15
        %p215 = scmp.lt.s32.totalorder %s26, 0
        %s216 = scalar_select %p215, %s26, 0
        %s217 = sadd.s32 %s216, %s214
        %s218 = smul.addr %s217, 8
        %s219 = scalar_lea.vmem %s0, %s218
        %s220 = smul.u32 8, %s25
        %s221 = smul.u32 8, %s26
        %p222 = scmp.lt.s32.totalorder %s221, 7
        %s223 = scalar_select %p222, %s221, 7
        %s224 = smul.addr %s223, 8
        %s225 = scalar_lea.vmem %s1, %s224
        %s226 = smul.u32 8, %s26
        %s227 = smul.u32 8, %s25
        %p228 = scmp.eq.s32.totalorder %s26, 0
        // Predicated region
        $region29: #{tpu_custom_call.1} parent=27 // pred_check
          %p229 = pneg %p228
        $region30: #{tpu_custom_call.1} parent=27 // pred_check_branch
          %231 = sbr.rel (%p229) target = $region32
        $region31: #{tpu_custom_call.1} parent=27 // pred_region
          %232 = vst [vmem:[#allocation2] sm:$0xff] 0.0
          %233 = vst [vmem:[#allocation2 + $0x8] sm:$0xff] 0.0
          %234 = vst [vmem:[#allocation2 + $0x10] sm:$0xff] 0.0
          %235 = vst [vmem:[#allocation2 + $0x18] sm:$0xff] 0.0
          %236 = vst [vmem:[#allocation2 + $0x20] sm:$0xff] 0.0
          %237 = vst [vmem:[#allocation2 + $0x28] sm:$0xff] 0.0
          %238 = vst [vmem:[#allocation2 + $0x30] sm:$0xff] 0.0
          %239 = vst [vmem:[#allocation2 + $0x38] sm:$0xff] 0.0
        $region32: #{tpu_custom_call.1} parent=27 // pred_fallthru
          _
        %v240 = vld [vmem:[#allocation2] sm:$0xff]
        %v241 = vld [vmem:[#allocation2 + $0x8] sm:$0xff]
        %v242 = vld [vmem:[#allocation2 + $0x10] sm:$0xff]
        %v243 = vld [vmem:[#allocation2 + $0x18] sm:$0xff]
        %v244 = vld [vmem:[#allocation2 + $0x20] sm:$0xff]
        %v245 = vld [vmem:[#allocation2 + $0x28] sm:$0xff]
        %v246 = vld [vmem:[#allocation2 + $0x30] sm:$0xff]
        %v247 = vld [vmem:[#allocation2 + $0x38] sm:$0xff]
        %v248 = vld [vmem:[%s219] sm:$0xff]
        %v249 = vld [vmem:[%s219 + $0x8] sm:$0xff]
        %v250 = vld [vmem:[%s219 + $0x10] sm:$0xff]
        %v251 = vld [vmem:[%s219 + $0x18] sm:$0xff]
        %v252 = vld [vmem:[%s219 + $0x20] sm:$0xff]
        %v253 = vld [vmem:[%s219 + $0x28] sm:$0xff]
        %v254 = vld [vmem:[%s219 + $0x30] sm:$0xff]
        %v255 = vld [vmem:[%s219 + $0x38] sm:$0xff]
        %v256 = vld [vmem:[%s225] sm:$0xff]
        %v257 = vld [vmem:[%s225 + $0x8] sm:$0xff]
        %v258 = vld [vmem:[%s225 + $0x10] sm:$0xff]
        %v259 = vld [vmem:[%s225 + $0x18] sm:$0xff]
        %v260 = vld [vmem:[%s225 + $0x20] sm:$0xff]
        %v261 = vld [vmem:[%s225 + $0x28] sm:$0xff]
        %v262 = vld [vmem:[%s225 + $0x30] sm:$0xff]
        %v263 = vld [vmem:[%s225 + $0x38] sm:$0xff]
        %vm264 = vcmask 523264
        %v266 = vsel %vm264, %v248, 0
        %v269 = vsel %vm264, %v249, 0
        %v272 = vsel %vm264, %v250, 0
        %v275 = vsel %vm264, %v251, 0
        %v278 = vsel %vm264, %v252, 0
        %v281 = vsel %vm264, %v253, 0
        %v284 = vsel %vm264, %v254, 0
        %v287 = vsel %vm264, %v255, 0
        %289 = vmatprep.subr.mxu0 0.0
        %290 = vmatpush1.msra.mxu0 %v256
        %291 = vmatprep.subr.mxu0 0.0
        %292 = vmatpush1.msra.mxu0 %v257
        %293 = vmatprep.subr.mxu0 0.0
        %294 = vmatpush1.msra.mxu0 %v258
        %295 = vmatprep.subr.mxu0 0.0
        %296 = vmatpush1.msra.mxu0 %v259
        %297 = vmatprep.subr.mxu0 0.0
        %298 = vmatpush1.msra.mxu0 %v260
        %299 = vmatprep.subr.mxu0 0.0
        %300 = vmatpush1.msra.mxu0 %v261
        %301 = vmatprep.subr.mxu0 0.0
        %302 = vmatpush1.msra.mxu0 %v262
        %303 = vmatprep.subr.mxu0 0.0
        %304 = vmatpush1.msra.mxu0 %v263
        %305 = vmatprep.subr.mxu0 0.0
        %306 = vmatpush1.msra.mxu0 0.0
        %307 = vmatprep.subr.mxu0 0.0
        %308 = vmatpush1.msra.mxu0 0.0
        %309 = vmatprep.subr.mxu0 0.0
        %310 = vmatpush1.msra.mxu0 0.0
        %311 = vmatprep.subr.mxu0 0.0
        %312 = vmatpush1.msra.mxu0 0.0
        %313 = vmatprep.subr.mxu0 0.0
        %314 = vmatpush1.msra.mxu0 0.0
        %315 = vmatprep.subr.mxu0 0.0
        %316 = vmatpush1.msra.mxu0 0.0
        %317 = vmatprep.subr.mxu0 0.0
        %318 = vmatpush1.msra.mxu0 0.0
        %319 = vmatprep.subr.mxu0 0.0
        %320 = vmatpush1.msra.mxu0 0.0
        %321 = vmatprep.subr.mxu0 0.0
        %322 = vmatpush1.msra.mxu0 0.0
        %323 = vmatprep.subr.mxu0 0.0
        %324 = vmatpush1.msra.mxu0 0.0
        %325 = vmatprep.subr.mxu0 0.0
        %326 = vmatpush1.msra.mxu0 0.0
        %327 = vmatprep.subr.mxu0 0.0
        %328 = vmatpush1.msra.mxu0 0.0
        %329 = vmatprep.subr.mxu0 0.0
        %330 = vmatpush1.msra.mxu0 0.0
        %331 = vmatprep.subr.mxu0 0.0
        %332 = vmatpush1.msra.mxu0 0.0
        %333 = vmatprep.subr.mxu0 0.0
        %334 = vmatpush1.msra.mxu0 0.0
        %335 = vmatprep.subr.mxu0 0.0
        %336 = vmatpush1.msra.mxu0 0.0
        %337 = vmatprep.subr.mxu0 0.0
        %338 = vmatpush1.msra.mxu0 0.0
        %339 = vmatprep.subr.mxu0 0.0
        %340 = vmatpush1.msra.mxu0 0.0
        %341 = vmatprep.subr.mxu0 0.0
        %342 = vmatpush1.msra.mxu0 0.0
        %343 = vmatprep.subr.mxu0 0.0
        %344 = vmatpush1.msra.mxu0 0.0
        %345 = vmatprep.subr.mxu0 0.0
        %346 = vmatpush1.msra.mxu0 0.0
        %347 = vmatprep.subr.mxu0 0.0
        %348 = vmatpush1.msra.mxu0 0.0
        %349 = vmatprep.subr.mxu0 0.0
        %350 = vmatpush1.msra.mxu0 0.0
        %351 = vmatprep.subr.mxu0 0.0
        %352 = vmatpush1.msra.mxu0 0.0
        %353 = vmatprep.mubr.f32.mxu0 0.0
        %354 = vmatmul.mubr.f32.gmra.mrb[0].mxu0 %v266
        %v355 = vpop.f32.mrb[0].mxu0
        %v356 = vadd.f32 0.0, %v355
        %v357 = vpop.f32.mrb[0].mxu0
        %358 = vmatprep.mubr.f32.mxu0 0.0
        %359 = vmatmul.mubr.f32.gmra.mrb[0].mxu0 %v269
        %v360 = vpop.f32.mrb[0].mxu0
        %v361 = vadd.f32 0.0, %v360
        %v362 = vpop.f32.mrb[0].mxu0
        %363 = vmatprep.mubr.f32.mxu0 0.0
        %364 = vmatmul.mubr.f32.gmra.mrb[0].mxu0 %v272
        %v365 = vpop.f32.mrb[0].mxu0
        %v366 = vadd.f32 0.0, %v365
        %v367 = vpop.f32.mrb[0].mxu0
        %368 = vmatprep.mubr.f32.mxu0 0.0
        %369 = vmatmul.mubr.f32.gmra.mrb[0].mxu0 %v275
        %v370 = vpop.f32.mrb[0].mxu0
        %v371 = vadd.f32 0.0, %v370
        %v372 = vpop.f32.mrb[0].mxu0
        %373 = vmatprep.mubr.f32.mxu0 0.0
        %374 = vmatmul.mubr.f32.gmra.mrb[0].mxu0 %v278
        %v375 = vpop.f32.mrb[0].mxu0
        %v376 = vadd.f32 0.0, %v375
        %v377 = vpop.f32.mrb[0].mxu0
        %378 = vmatprep.mubr.f32.mxu0 0.0
        %379 = vmatmul.mubr.f32.gmra.mrb[0].mxu0 %v281
        %v380 = vpop.f32.mrb[0].mxu0
        %v381 = vadd.f32 0.0, %v380
        %v382 = vpop.f32.mrb[0].mxu0
        %383 = vmatprep.mubr.f32.mxu0 0.0
        %384 = vmatmul.mubr.f32.gmra.mrb[0].mxu0 %v284
        %v385 = vpop.f32.mrb[0].mxu0
        %v386 = vadd.f32 0.0, %v385
        %v387 = vpop.f32.mrb[0].mxu0
        %388 = vmatprep.mubr.f32.mxu0 0.0
        %389 = vmatmul.mubr.f32.gmra.mrb[0].mxu0 %v287
        %v390 = vpop.f32.mrb[0].mxu0
        %v391 = vadd.f32 0.0, %v390
        %v392 = vpop.f32.mrb[0].mxu0
        %393 = vdwg.mxu0
        %v394 = vadd.f32 %v240, %v356
        %v395 = vadd.f32 %v241, %v361
        %v396 = vadd.f32 %v242, %v366
        %v397 = vadd.f32 %v243, %v371
        %v398 = vadd.f32 %v244, %v376
        %v399 = vadd.f32 %v245, %v381
        %v400 = vadd.f32 %v246, %v386
        %v401 = vadd.f32 %v247, %v391
        %402 = vst [vmem:[#allocation2] sm:$0xff] %v394
        %403 = vst [vmem:[#allocation2 + $0x8] sm:$0xff] %v395
        %404 = vst [vmem:[#allocation2 + $0x10] sm:$0xff] %v396
        %405 = vst [vmem:[#allocation2 + $0x18] sm:$0xff] %v397
        %406 = vst [vmem:[#allocation2 + $0x20] sm:$0xff] %v398
        %407 = vst [vmem:[#allocation2 + $0x28] sm:$0xff] %v399
        %408 = vst [vmem:[#allocation2 + $0x30] sm:$0xff] %v400
        %409 = vst [vmem:[#allocation2 + $0x38] sm:$0xff] %v401
        // Predicated region
        $region33: #{tpu_custom_call.1} parent=27 // pred_check
          %p410 = pneg %p228
        $region34: #{tpu_custom_call.1} parent=27 // pred_check_branch
          %412 = sbr.rel (%p410) target = $region36
        $region35: #{tpu_custom_call.1} parent=27 // pred_region
          %v413 = vld [vmem:[#allocation2] sm:$0xff]
          %v414 = vld [vmem:[#allocation2 + $0x8] sm:$0xff]
          %v415 = vld [vmem:[#allocation2 + $0x10] sm:$0xff]
          %v416 = vld [vmem:[#allocation2 + $0x18] sm:$0xff]
          %v417 = vld [vmem:[#allocation2 + $0x20] sm:$0xff]
          %v418 = vld [vmem:[#allocation2 + $0x28] sm:$0xff]
          %v419 = vld [vmem:[#allocation2 + $0x30] sm:$0xff]
          %v420 = vld [vmem:[#allocation2 + $0x38] sm:$0xff]
          %421 = vst [vmem:[%s204] sm:$0xff] %v413
          %422 = vst [vmem:[%s204 + $0x8] sm:$0xff] %v414
          %423 = vst [vmem:[%s204 + $0x10] sm:$0xff] %v415
          %424 = vst [vmem:[%s204 + $0x18] sm:$0xff] %v416
          %425 = vst [vmem:[%s204 + $0x20] sm:$0xff] %v417
          %426 = vst [vmem:[%s204 + $0x28] sm:$0xff] %v418
          %427 = vst [vmem:[%s204 + $0x30] sm:$0xff] %v419
          %428 = vst [vmem:[%s204 + $0x38] sm:$0xff] %v420
          %v429 = vadd.f32 %v413, %v414
          %v430 = vadd.f32 %v429, %v415
          %v431 = vadd.f32 %v430, %v416
          %v432 = vadd.f32 %v431, %v417
          %v433 = vadd.f32 %v432, %v418
          %v434 = vadd.f32 %v433, %v419
          %v435 = vadd.f32 %v434, %v420
          %v436 = vrot.slane %v435, 4
          %v437 = vadd.f32 %v435, %v436
          %v438 = vrot.slane %v437, 2
          %v439 = vadd.f32 %v437, %v438
          %v440 = vrot.slane %v439, 1
          %v441 = vadd.f32 %v439, %v440
          %442 = vst [vmem:[%s211] sm:$0x1] %v441
          %v443 = vmul.f32 %v413, %v413
          %v444 = vmul.f32 %v414, %v414
          %v445 = vmul.f32 %v415, %v415
          %v446 = vmul.f32 %v416, %v416
          %v447 = vmul.f32 %v417, %v417
          %v448 = vmul.f32 %v418, %v418
          %v449 = vmul.f32 %v419, %v419
          %v450 = vmul.f32 %v420, %v420
          %v451 = vadd.f32 %v443, %v444
          %v452 = vadd.f32 %v451, %v445
          %v453 = vadd.f32 %v452, %v446
          %v454 = vadd.f32 %v453, %v447
          %v455 = vadd.f32 %v454, %v448
          %v456 = vadd.f32 %v455, %v449
          %v457 = vadd.f32 %v456, %v450
          %v458 = vrot.slane %v457, 4
          %v459 = vadd.f32 %v457, %v458
          %v460 = vrot.slane %v459, 2
          %v461 = vadd.f32 %v459, %v460
          %v462 = vrot.slane %v461, 1
          %v463 = vadd.f32 %v461, %v462
          %464 = vst [vmem:[%s211 + $0x1] sm:$0x1] %v463
        $region36: #{tpu_custom_call.1} parent=27 // pred_fallthru
          _
        %s465 = sand.u32 %s95, 1
        %s466 = scalar_lea.sflag [#allocation4], %s465
        %s467 = sand.u32 %s95, 1
        %s468 = smul.addr %s467, 64
        %s469 = scalar_lea.vmem [#allocation3], %s468
        %s470 = sand.u32 %s121, 1
        %s471 = scalar_lea.sflag [#allocation6], %s470
        %s472 = sand.u32 %s121, 1
        %s473 = smul.addr %s472, 2
        %s474 = scalar_lea.vmem [#allocation5], %s473
        // Predicated region
        $region37: #{tpu_custom_call.1} parent=27 // pred_check
          %p475 = pneg %p105
        $region38: #{tpu_custom_call.1} parent=27 // pred_check_branch
          %477 = sbr.rel (%p475) target = $region40
        $region39: #{tpu_custom_call.1} parent=27 // pred_region
          %s478 = smul.u32 8, %s25
          %s480 = ssub.s32 1024, 1024
          %481 = vsyncadd %s466, %s480
          %s482 = smul.addr %s478, 128
          %s483 = scalar_lea.hbm %s2, %s482
          %s484 = sshll.u32 %s469, 4
          %s485 = int_to_ptr.vmem [resolvable:$true] %s484
          %490 = dma.vmem_to_hbm [thread:$0]  %s485, 1024, %s483, %s466, 128, 128, 8
        $region40: #{tpu_custom_call.1} parent=27 // pred_fallthru
          _
        // Predicated region
        $region41: #{tpu_custom_call.1} parent=27 // pred_check
          %p491 = pneg %p131
        $region42: #{tpu_custom_call.1} parent=27 // pred_check_branch
          %493 = sbr.rel (%p491) target = $region44
        $region43: #{tpu_custom_call.1} parent=27 // pred_region
          %s495 = ssub.s32 32, 32
          %496 = vsyncadd %s471, %s495
          %s497 = smul.addr %s25, 32
          %s498 = scalar_lea.hbm %s3, %s497
          %s500 = sshll.u32 %s474, 4
          %s501 = int_to_ptr.vmem [resolvable:$true] %s500
          %503 = dma.vmem_to_hbm [thread:$0]  %s501, 32, %s498, %s471
        $region44: #{tpu_custom_call.1} parent=27 // pred_fallthru
          _
      $region28: #{tpu_custom_call.1} parent=5 // pred_fallthru
        _
      %p504 = scmp.le.s32.totalorder 2, %s16
      // Predicated region
      $region45: #{tpu_custom_call.1} parent=5 // pred_check
        %p505 = pneg %p504
      $region46: #{tpu_custom_call.1} parent=5 // pred_check_branch
        %507 = sbr.rel (%p505) target = $region48
      $region47: #{tpu_custom_call.1} parent=5 // pred_region
        %s508 = ssub.s32 %s16, 2
        // Predicated region
        $region49: #{tpu_custom_call.1} parent=47 // pred_check
          %p509 = pneg %p111
        $region50: #{tpu_custom_call.1} parent=47 // pred_check_branch
          %511 = sbr.rel (%p509) target = $region52
        $region51: #{tpu_custom_call.1} parent=47 // pred_region
          %s512 = sand.u32 %s96, 1
          %s513 = scalar_lea.sflag [#allocation4], %s512
          %s514 = sand.u32 %s96, 1
          %s515 = smul.addr %s514, 64
          %s516 = scalar_lea.vmem [#allocation3], %s515
          %517 = dma.done %s513, 1024
        $region52: #{tpu_custom_call.1} parent=47 // pred_fallthru
          _
        // Predicated region
        $region53: #{tpu_custom_call.1} parent=47 // pred_check
          %p518 = pneg %p137
        $region54: #{tpu_custom_call.1} parent=47 // pred_check_branch
          %520 = sbr.rel (%p518) target = $region56
        $region55: #{tpu_custom_call.1} parent=47 // pred_region
          %s521 = sand.u32 %s122, 1
          %s522 = scalar_lea.sflag [#allocation6], %s521
          %s523 = sand.u32 %s122, 1
          %s524 = smul.addr %s523, 2
          %s525 = scalar_lea.vmem [#allocation5], %s524
          %526 = dma.done %s522, 32
        $region56: #{tpu_custom_call.1} parent=47 // pred_fallthru
          _
      $region48: #{tpu_custom_call.1} parent=5 // pred_fallthru
        _
    $region6: #{tpu_custom_call.1} parent=1 // loop_footer
      %s20 = sadd.s32 1, %s16
    $region7: #{tpu_custom_call.1} parent=1 // loop_footer_branch
      %15 = sbr.rel target = $region3
    $region8: #{tpu_custom_call.1} parent=1 // loop_exit
      _
    %527 = vsyncpa [#allocation4], 1
    %s528 = scalar_lea.sflag [#allocation4], 1
    %529 = vsyncpa %s528, 1
    %530 = vsyncpa [#allocation6], 1
    %s531 = scalar_lea.sflag [#allocation6], 1
    %532 = vsyncpa %s531, 1

</llo_original>
